<compile_context>
chip_gen: v6e
topology: v6e:2x2x1
jax: 0.10.0
libtpu: 0.0.40
codegen_flags: <defaults>
</compile_context>

<pallas_src>
import functools
import math

import jax
import jax.numpy as jnp
from jax.experimental import pallas as pl
from jax.experimental.pallas import tpu as pltpu


# ----------------------------------------------------------------------------
# PE buffer (mirrors the PyTorch __init__ registered buffer; built once)
# ----------------------------------------------------------------------------
def build_positional_encoding(max_len, d_model, dtype=jnp.float32):
    """pe[pos, 0, 2i] = sin(pos * w_i), pe[pos, 0, 2i+1] = cos(pos * w_i)."""
    assert d_model % 2 == 0, "even d_model (same constraint as the PyTorch code)"
    position = jnp.arange(max_len, dtype=jnp.float32)[:, None]             # (L, 1)
    div_term = jnp.exp(jnp.arange(0, d_model, 2, dtype=jnp.float32)
                       * (-math.log(10000.0) / d_model))                    # (D/2,)
    angles = position * div_term                                            # (L, D/2)
    pe = jnp.zeros((max_len, 1, d_model), dtype=jnp.float32)
    pe = pe.at[:, 0, 0::2].set(jnp.sin(angles))
    pe = pe.at[:, 0, 1::2].set(jnp.cos(angles))
    return pe.astype(dtype)


# ----------------------------------------------------------------------------
# Kernels
# ----------------------------------------------------------------------------
def _pe_add_lanefold_kernel(x_ref, pe_ref, o_ref, *, batch, d_model):
    # x_ref/o_ref: (block_s, B*D); pe_ref: (block_s, D).  D % 128 == 0, so every
    # column block is whole vregs -> dense loads and unmasked stores.
    pe = pe_ref[...]
    for b in range(batch):
        sl = pl.ds(b * d_model, d_model)
        o_ref[:, sl] = (x_ref[:, sl] + pe).astype(o_ref.dtype)


def _pe_add_3d_kernel(x_ref, pe_ref, o_ref):
    # Fallback layout: x_ref (block_s, B, D), pe_ref (block_s, 1, D) broadcast.
    o_ref[...] = (x_ref[...] + pe_ref[...]).astype(o_ref.dtype)


def _pe_add_dropout_lanefold_kernel(seed_ref, x_ref, pe_ref, o_ref, *,
                                    dropout_p, batch, d_model):
    # Training-mode dropout via the on-chip PRNG; tile index mixed into seed.
    pltpu.prng_seed(seed_ref[0] * 2003 + pl.program_id(0) * 7919 + 1)
    pe = pe_ref[...]
    threshold = jnp.uint32(int(dropout_p * 4294967296.0))   # P(bits < thr) = p
    scale = jnp.float32(1.0 / (1.0 - dropout_p))
    for b in range(batch):
        sl = pl.ds(b * d_model, d_model)
        y = x_ref[:, sl] + pe
        bits = pltpu.bitcast(pltpu.prng_random_bits(y.shape), jnp.uint32)
        o_ref[:, sl] = jnp.where(bits >= threshold, y * scale, 0.0).astype(o_ref.dtype)


def _pe_add_dropout_3d_kernel(seed_ref, x_ref, pe_ref, o_ref, *, dropout_p):
    pltpu.prng_seed(seed_ref[0] * 2003 + pl.program_id(0) * 7919 + 1)
    y = x_ref[...] + pe_ref[...]
    bits = pltpu.bitcast(pltpu.prng_random_bits(y.shape), jnp.uint32)
    threshold = jnp.uint32(int(dropout_p * 4294967296.0))
    scale = jnp.float32(1.0 / (1.0 - dropout_p))
    o_ref[...] = jnp.where(bits >= threshold, y * scale, 0.0).astype(o_ref.dtype)


# ----------------------------------------------------------------------------
# Tile sizing (byte-budgeted; fits scoped VMEM on v5e/v6e/v7x)
# ----------------------------------------------------------------------------
_VMEM_TILE_BUDGET = 8 * 1024 * 1024   # total double-buffered x-in + out + pe tiles


def _choose_block_s(S, row_bytes_x, row_bytes_pe, budget=_VMEM_TILE_BUDGET):
    """Largest S-tile (multiple of 8, dividing S) whose double-buffered
    footprint 2*(2*x_row + pe_row)*block_s stays under `budget` bytes."""
    per_row = 2 * (2 * row_bytes_x + row_bytes_pe)
    max_rows = max(8, (budget // per_row) // 8 * 8)
    if S <= max_rows:
        return S                      # single step; no forced splitting
    for cand in range(max_rows, 7, -8):
        if S % cand == 0:
            return cand
    return S                          # no multiple-of-8 divisor fits; one big block


# ----------------------------------------------------------------------------
# Wrapper
# ----------------------------------------------------------------------------
def positional_encoding_forward(x, pe, *, dropout_p=0.1, training=False, seed=0):
    """x: (S, B, D) seq-first like the PyTorch module; pe: (max_len, 1, D)."""
    S, B, D = x.shape
    max_len = pe.shape[0]
    assert pe.shape == (max_len, 1, D) and max_len >= S
    pe = pe.astype(x.dtype)                       # keep pe DMA bytes in x.dtype
    itemsize = jnp.dtype(x.dtype).itemsize
    sublane = (32 // (8 * itemsize)) * 8          # 8 (f32) / 16 (bf16) / 32 (i8)

    lane_fold = (D % 128 == 0)
    if lane_fold:
        # Sublane- and lane-dense layout: (S, B*D) rows, pe as (max_len, D).
        x_arr = x.reshape(S, B * D)
        pe_arr = pe.reshape(max_len, D)
        row_x, row_pe = B * D * itemsize, D * itemsize
        block_s = _choose_block_s(S, row_x, row_pe)
        if block_s % 8 != 0 and S != max_len:
            pe_arr = pe_arr[:S]        # keep pe block legal when block_s == S
        x_block, pe_block = (block_s, B * D), (block_s, D)

        def x_map(i, *_): return (i, 0)
        pe_map = x_map
        kernel = functools.partial(_pe_add_lanefold_kernel, batch=B, d_model=D)
        dkernel = functools.partial(_pe_add_dropout_lanefold_kernel,
                                    dropout_p=float(dropout_p), batch=B, d_model=D)
        out_struct = jax.ShapeDtypeStruct((S, B * D), x.dtype)
    else:
        # TODO(synk): pad D to a multiple of 128 for lane-dense stores when
        # d_model is not 128-aligned; this fallback keeps batch on sublanes.
        x_arr, pe_arr = x, pe
        row_x = -(-B // sublane) * sublane * D * itemsize
        row_pe = sublane * D * itemsize
        block_s = _choose_block_s(S, row_x, row_pe)
        if block_s % 8 != 0 and S != max_len:
            pe_arr = pe_arr[:S]
        x_block, pe_block = (block_s, B, D), (block_s, 1, D)

        def x_map(i, *_): return (i, 0, 0)
        pe_map = x_map
        kernel = _pe_add_3d_kernel
        dkernel = functools.partial(_pe_add_dropout_3d_kernel,
                                    dropout_p=float(dropout_p))
        out_struct = jax.ShapeDtypeStruct((S, B, D), x.dtype)

    assert S % block_s == 0
    grid = (S // block_s,)

    footprint = 2 * (2 * row_x + row_pe) * block_s
    vmem_limit = int(min(max(footprint + (4 << 20), 16 << 20), 48 << 20))
    params = pltpu.CompilerParams(dimension_semantics=("parallel",),
                                  vmem_limit_bytes=vmem_limit)

    if not training or dropout_p == 0.0:
        out = pl.pallas_call(
            kernel,
            out_shape=out_struct,
            grid_spec=pltpu.PrefetchScalarGridSpec(
                num_scalar_prefetch=0,
                grid=grid,
                in_specs=[pl.BlockSpec(x_block, x_map),     # x
                          pl.BlockSpec(pe_block, pe_map)],  # pe
                out_specs=pl.BlockSpec(x_block, x_map),
            ),
            input_output_aliases={0: 0},                    # result over x's buffer
            compiler_params=params,
        )(x_arr, pe_arr)
    else:
        assert 0.0 < dropout_p < 1.0
        seed_arr = jnp.asarray([seed], dtype=jnp.int32)
        out = pl.pallas_call(
            dkernel,
            out_shape=out_struct,
            grid_spec=pltpu.PrefetchScalarGridSpec(
                num_scalar_prefetch=1,                      # seed -> SMEM
                grid=grid,
                in_specs=[pl.BlockSpec(x_block, x_map),
                          pl.BlockSpec(pe_block, pe_map)],
                out_specs=pl.BlockSpec(x_block, x_map),
            ),
            input_output_aliases={1: 0},                    # x is arg 1 after seed
            compiler_params=params,
        )(seed_arr, x_arr, pe_arr)

    return out.reshape(S, B, D)


def positional_encoding_reference(x, pe):
    """Pure-JAX reference for eval-mode PositionalEncoding.forward."""
    return x + pe[: x.shape[0]]


# ----------------------------------------------------------------------------
# Demo / self-check
# ----------------------------------------------------------------------------
if __name__ == "__main__":
    # (seq_len, batch, d_model) exactly like the PyTorch module; d_model=128
    # keeps the lane (last) dimension fully dense.
    S, B, D = 16, 2, 128
    MAX_LEN = 64

    key = jax.random.PRNGKey(0)
    x = jax.random.normal(key, (S, B, D), dtype=jnp.float32)
    pe = build_positional_encoding(MAX_LEN, D, dtype=jnp.float32)

    # Reference computed before the kernel call (kernel aliases x's buffer).
    ref = positional_encoding_reference(x, pe)

    fwd = jax.jit(functools.partial(positional_encoding_forward,
                                    dropout_p=0.1, training=False))
    out = jax.block_until_ready(fwd(x, pe))

    assert out.shape == (S, B, D)
    assert jnp.allclose(out, ref, atol=1e-6, rtol=1e-6), "mismatch vs reference"

    print("KERNEL_OK")
</pallas_src>

<mosaic_0001>
module attributes {stable_mosaic.version = 11 : i64} {
  func.func @_pe_add_lanefold_kernel(%arg0: i32, %arg1: memref<16x256xf32, #tpu.memory_space<vmem>>, %arg2: memref<16x128xf32, #tpu.memory_space<vmem>>, %arg3: memref<16x256xf32, #tpu.memory_space<vmem>>) attributes {dimension_semantics = [#tpu.dimension_semantics<parallel>], iteration_bounds = array<i64: 1>, scalar_prefetch = 0 : i64, scratch_operands = 0 : i64, tpu.core_type = #tpu.core_type<tc>, window_params = [{transform_indices = @transform_0, window_bounds = array<i64: 16, 256>}, {transform_indices = @transform_1, window_bounds = array<i64: 16, 128>}, {transform_indices = @transform_2, window_bounds = array<i64: 16, 256>}]} {
    %c0 = arith.constant 0 : index
    %c0_0 = arith.constant 0 : index
    %0 = vector.load %arg2[%c0, %c0_0] : memref<16x128xf32, #tpu.memory_space<vmem>>, vector<16x128xf32>
    %c0_1 = arith.constant 0 : index
    %c0_2 = arith.constant 0 : index
    %1 = vector.load %arg1[%c0_1, %c0_2] : memref<16x256xf32, #tpu.memory_space<vmem>>, vector<16x128xf32>
    %2 = arith.addf %1, %0 : vector<16x128xf32>
    %c0_3 = arith.constant 0 : index
    %c0_4 = arith.constant 0 : index
    %3 = vector.load %arg3[%c0_3, %c0_4] : memref<16x256xf32, #tpu.memory_space<vmem>>, vector<16x128xf32>
    tpu.vector_store %arg3[%c0_3, %c0_4], %2 {strides = array<i32>} : memref<16x256xf32, #tpu.memory_space<vmem>>, vector<16x128xf32>,
    %c0_5 = arith.constant 0 : index
    %c128 = arith.constant 128 : index
    %4 = vector.load %arg1[%c0_5, %c128] : memref<16x256xf32, #tpu.memory_space<vmem>>, vector<16x128xf32>
    %5 = arith.addf %4, %0 : vector<16x128xf32>
    %c0_6 = arith.constant 0 : index
    %c128_7 = arith.constant 128 : index
    %6 = vector.load %arg3[%c0_6, %c128_7] : memref<16x256xf32, #tpu.memory_space<vmem>>, vector<16x128xf32>
    tpu.vector_store %arg3[%c0_6, %c128_7], %5 {strides = array<i32>} : memref<16x256xf32, #tpu.memory_space<vmem>>, vector<16x128xf32>,
    return
  }
  func.func @transform_0(%arg0: i32) -> (i32, i32) {
    %c0_i32 = arith.constant 0 : i32
    %c0_i32_0 = arith.constant 0 : i32
    return %arg0, %c0_i32 : i32, i32
  }
  func.func @transform_1(%arg0: i32) -> (i32, i32) {
    %c0_i32 = arith.constant 0 : i32
    %c0_i32_0 = arith.constant 0 : i32
    return %arg0, %c0_i32 : i32, i32
  }
  func.func @transform_2(%arg0: i32) -> (i32, i32) {
    %c0_i32 = arith.constant 0 : i32
    %c0_i32_0 = arith.constant 0 : i32
    return %arg0, %c0_i32 : i32, i32
  }
}

</mosaic_0001>

<llo_original>
// kernel: positional_encoding_forward.1
$region0: #{positional_encoding_forward.1}
  #allocation0 [shape = 'u32[]', space=smem, size = 0x4, offset = 0x4, fixed_abs, tag = 'smem constant byte address 0x4 - core index']
  #allocation1 [shape = 'u32[144,128]{1,0:T(1,128)}', space=vmem, size = 0x12000, scoped, tag = 'internal scratch']
  %s0 = inlined_call_operand.vmem [shape: f32[16,256], index: 0, kind: input, shape index: {}, may-alias: {0,2}]
  %s1 = inlined_call_operand.vmem [shape: f32[64,128], index: 1, kind: input, shape index: {}]
  %s2 = inlined_call_operand.vmem [shape: f32[16,256], index: 2, kind: output, shape index: {}, may-alias: {0,2}]
  %s3 = sld [smem:[#allocation0]]
  $region18: #{positional_encoding_forward.1} parent=0
    _
  %s5 = ssub.s32 1, %s3
  %s6 = scalar_select 0, %s5, %s3
  // Predicated region
  $region2: #{positional_encoding_forward.1} parent=0 // pred_check
    _
  $region3: #{positional_encoding_forward.1} parent=0 // pred_check_branch
    %8 = sbr.rel (0) target = $region5
  $region4: #{positional_encoding_forward.1} parent=0 // pred_region
    _
  $region5: #{positional_encoding_forward.1} parent=0 // pred_fallthru
    _
  // Predicated region
  $region6: #{positional_encoding_forward.1} parent=0 // pred_check
    _
  $region7: #{positional_encoding_forward.1} parent=0 // pred_check_branch
    %10 = sbr.rel (0) target = $region9
  $region8: #{positional_encoding_forward.1} parent=0 // pred_region
    _
  $region9: #{positional_encoding_forward.1} parent=0 // pred_fallthru
    _
  %v11 = vld [vmem:[%s1] sm:$0xff]
  %v12 = vld [vmem:[%s1 + $0x8] sm:$0xff]
  %v13 = vld [vmem:[%s0] sm:$0xff]
  %v14 = vld [vmem:[%s0 + $0x10] sm:$0xff]
  %v15 = vadd.f32 %v13, %v11
  %v16 = vadd.f32 %v14, %v12
  %17 = vst [vmem:[%s2] sm:$0xff] %v15
  %18 = vst [vmem:[%s2 + $0x10] sm:$0xff] %v16
  %v19 = vld [vmem:[%s0 + $0x8] sm:$0xff]
  %v20 = vld [vmem:[%s0 + $0x18] sm:$0xff]
  %v21 = vadd.f32 %v19, %v11
  %v22 = vadd.f32 %v20, %v12
  %23 = vst [vmem:[%s2 + $0x8] sm:$0xff] %v21
  %24 = vst [vmem:[%s2 + $0x18] sm:$0xff] %v22
  // Predicated region
  $region10: #{positional_encoding_forward.1} parent=0 // pred_check
    _
  $region11: #{positional_encoding_forward.1} parent=0 // pred_check_branch
    %26 = sbr.rel (0) target = $region13
  $region12: #{positional_encoding_forward.1} parent=0 // pred_region
    _
  $region13: #{positional_encoding_forward.1} parent=0 // pred_fallthru
    _
  // Predicated region
  $region14: #{positional_encoding_forward.1} parent=0 // pred_check
    _
  $region15: #{positional_encoding_forward.1} parent=0 // pred_check_branch
    %28 = sbr.rel (0) target = $region17
  $region16: #{positional_encoding_forward.1} parent=0 // pred_region
    _
  $region17: #{positional_encoding_forward.1} parent=0 // pred_fallthru
    _

</llo_original>
